<compile_context>
chip_gen: v7x
topology: tpu7x:2x2x1
jax: 0.10.0
libtpu: 0.0.40
codegen_flags: <defaults>
</compile_context>

<pallas_src>
import jax
import jax.numpy as jnp
from jax.experimental import pallas as pl
from jax.experimental.pallas import tpu as pltpu


def _toy_kernel(x_ref, w1_ref, b1_ref, w2_ref, b2_ref, o_ref):
    # x_ref / o_ref: (B, 2, R, 128) VMEM blocks (dense per-channel spatial slabs)
    # w1_ref: (4, 2) SMEM (BN-folded), b1_ref: (4,) SMEM (BN-folded)
    # w2_ref: (2, 4) SMEM,             b2_ref: (2,) SMEM
    x0 = x_ref[:, 0]  # (B, R, 128)
    x1 = x_ref[:, 1]  # (B, R, 128)

    # Conv1 (1x1, BN folded) + ReLU, with conv2 accumulated on the fly:
    # at most x0, x1, h, acc0, acc1 are live (no list of 4 hidden planes).
    h = jnp.maximum(w1_ref[0, 0] * x0 + w1_ref[0, 1] * x1 + b1_ref[0], 0.0)
    acc0 = h * w2_ref[0, 0] + b2_ref[0]
    acc1 = h * w2_ref[1, 0] + b2_ref[1]
    for c in range(1, 4):
        h = jnp.maximum(w1_ref[c, 0] * x0 + w1_ref[c, 1] * x1 + b1_ref[c], 0.0)
        acc0 = acc0 + h * w2_ref[0, c]
        acc1 = acc1 + h * w2_ref[1, c]

    o_ref[:, 0] = acc0
    o_ref[:, 1] = acc1


def _round_up(x, m):
    return ((x + m - 1) // m) * m


def _fold_batchnorm(params, eps=1e-5):
    """Fold BatchNorm2d (eval) into conv1:  y = scale*(w1@x + b1) + shift."""
    w1, b1 = params["w1"], params["b1"]
    gamma, beta = params["gamma"], params["beta"]
    mean, var = params["running_mean"], params["running_var"]
    inv_std = 1.0 / jnp.sqrt(var + eps)
    scale = gamma * inv_std                              # (4,)
    shift = beta - gamma * mean * inv_std                # (4,)
    w1p = (scale[:, None] * w1).astype(jnp.float32)      # (4, 2)
    b1p = (scale * b1 + shift).astype(jnp.float32)       # (4,)
    return w1p, b1p


def toy_model_v2_forward(x_nchw, params, *, block_rows=1024,
                         tiny_bytes_threshold=2 << 20):
    """x_nchw: (N, 2, H, W) float32 -> (N, 2, H, W) float32."""
    N, C_in, H, W = x_nchw.shape
    assert C_in == 2
    HW = H * W
    assert HW % 128 == 0, "H*W must be a multiple of 128 for the dense lane layout"
    rows = HW // 128

    w1p, b1p = _fold_batchnorm(params)
    w2 = params["w2"].astype(jnp.float32)
    b2 = params["b2"].astype(jnp.float32)

    # Free contiguous reshape: NCHW -> (N, C, HW//128, 128).  No HBM transpose.
    x4 = x_nchw.reshape(N, C_in, rows, 128)
    x_bytes = x4.size * 4

    smem_spec = pl.BlockSpec(memory_space=pltpu.MemorySpace.SMEM)

    if x_bytes <= tiny_bytes_threshold:
        # Tiny problem: fold batch + all spatial rows into a single block so the
        # whole forward is one grid step / one DMA pair (per-step overhead
        # dominates at this size).  Partial sublane tile is masked by Pallas.
        R = _round_up(rows, 8)
        grid = (1,)
        x_spec = pl.BlockSpec((N, C_in, R, 128), lambda t: (0, 0, 0, 0))
        o_spec = pl.BlockSpec((N, 2, R, 128), lambda t: (0, 0, 0, 0))
        dim_sem = ("arbitrary",)
    else:
        # Fixed block + cdiv grid: Pallas masks the edge block, so no divisor
        # search (which could degrade to 8-row tiles) and no oversized-block
        # VMEM blow-up for awkward row counts.
        R = min(_round_up(block_rows, 8), _round_up(rows, 8))
        n_tiles = pl.cdiv(rows, R)
        # Keep >= 2 grid steps when possible so v7x's two TensorCores both work.
        if N * n_tiles < 2 and rows > 8:
            R = _round_up(pl.cdiv(rows, 2), 8)
            n_tiles = pl.cdiv(rows, R)
        grid = (N, n_tiles)
        x_spec = pl.BlockSpec((1, C_in, R, 128), lambda n, t: (n, 0, t, 0))
        o_spec = pl.BlockSpec((1, 2, R, 128), lambda n, t: (n, 0, t, 0))
        dim_sem = ("parallel", "parallel")

    out4 = pl.pallas_call(
        _toy_kernel,
        out_shape=jax.ShapeDtypeStruct((N, 2, rows, 128), jnp.float32),
        grid_spec=pltpu.PrefetchScalarGridSpec(
            num_scalar_prefetch=0,
            grid=grid,
            in_specs=[
                x_spec,      # x tile (VMEM)
                smem_spec,   # w1 (BN-folded) scalars
                smem_spec,   # b1 (BN-folded)
                smem_spec,   # w2
                smem_spec,   # b2
            ],
            out_specs=o_spec,
        ),
        compiler_params=pltpu.CompilerParams(
            dimension_semantics=dim_sem,
        ),
    )(x4, w1p, b1p, w2, b2)

    # Free contiguous reshape back to NCHW.
    return out4.reshape(N, 2, H, W)


def init_params(key):
    k1, k2, k3, k4, k5, k6 = jax.random.split(key, 6)
    params = {
        # Conv2d(2, 4, kernel=1): weight (4, 2, 1, 1) -> stored as (4, 2)
        "w1": jax.random.normal(k1, (4, 2), jnp.float32) * 0.5,
        "b1": jax.random.normal(k2, (4,), jnp.float32) * 0.1,
        # BatchNorm2d(4): affine + running stats (deterministic, non-trivial)
        "gamma": jnp.linspace(0.5, 1.5, 4, dtype=jnp.float32),
        "beta": jnp.linspace(-0.2, 0.2, 4, dtype=jnp.float32),
        "running_mean": jax.random.normal(k3, (4,), jnp.float32) * 0.1,
        "running_var": jnp.abs(jax.random.normal(k4, (4,), jnp.float32)) + 0.5,
        # Conv2d(4, 2, kernel=1): weight (2, 4, 1, 1) -> stored as (2, 4)
        "w2": jax.random.normal(k5, (2, 4), jnp.float32) * 0.5,
        "b2": jax.random.normal(k6, (2,), jnp.float32) * 0.1,
    }
    return params


def _reference(x_nchw, params):
    """Pure-JAX reference of the same forward (for sanity checking)."""
    eps = 1e-5
    h = jnp.einsum("oc,nchw->nohw", params["w1"], x_nchw) + params["b1"][None, :, None, None]
    inv_std = 1.0 / jnp.sqrt(params["running_var"] + eps)
    h = (h - params["running_mean"][None, :, None, None]) * inv_std[None, :, None, None]
    h = h * params["gamma"][None, :, None, None] + params["beta"][None, :, None, None]
    h = jnp.maximum(h, 0.0)
    y = jnp.einsum("oc,nchw->nohw", params["w2"], h) + params["b2"][None, :, None, None]
    return y


if __name__ == "__main__":
    key = jax.random.PRNGKey(0)
    kx, kp = jax.random.split(key)
    params = init_params(kp)

    # Small shape consistent with the module: batch=2, in_channels=2, 16x16 spatial.
    # Hits the single-step "tiny" path (batch folded into the block).
    x_small = jax.random.normal(kx, (2, 2, 16, 16), jnp.float32)
    out_small = jax.block_until_ready(toy_model_v2_forward(x_small, params))
    ref_small = _reference(x_small, params)
    assert out_small.shape == (2, 2, 16, 16)
    assert jnp.allclose(out_small, ref_small, atol=1e-5, rtol=1e-5)

    # Also exercise the fixed-block + cdiv-grid path with a masked edge tile
    # (rows=72, block=64 -> 2 spatial tiles, second one partial).
    x_big = jax.random.normal(kx, (2, 2, 96, 96), jnp.float32)
    out_big = jax.block_until_ready(
        toy_model_v2_forward(x_big, params, block_rows=64, tiny_bytes_threshold=0))
    ref_big = _reference(x_big, params)
    assert jnp.allclose(out_big, ref_big, atol=1e-5, rtol=1e-5)

    print("KERNEL_OK")
</pallas_src>

<mosaic_0001>
module attributes {stable_mosaic.version = 11 : i64} {
  func.func @_toy_kernel(%arg0: i32, %arg1: memref<2x2x8x128xf32, #tpu.memory_space<vmem>>, %arg2: memref<4x2xf32, #tpu.memory_space<smem>>, %arg3: memref<4xf32, #tpu.memory_space<smem>>, %arg4: memref<2x4xf32, #tpu.memory_space<smem>>, %arg5: memref<2xf32, #tpu.memory_space<smem>>, %arg6: memref<2x2x8x128xf32, #tpu.memory_space<vmem>>) attributes {dimension_semantics = [#tpu.dimension_semantics<arbitrary>], iteration_bounds = array<i64: 1>, scalar_prefetch = 0 : i64, scratch_operands = 0 : i64, tpu.core_type = #tpu.core_type<tc>, window_params = [{transform_indices = @transform_0, window_bounds = array<i64: 2, 2, 8, 128>}, {transform_indices = @transform_1, window_bounds = array<i64: 4, 2>}, {transform_indices = @transform_2, window_bounds = array<i64: 4>}, {transform_indices = @transform_3, window_bounds = array<i64: 2, 4>}, {transform_indices = @transform_4, window_bounds = array<i64: 2>}, {transform_indices = @transform_5, window_bounds = array<i64: 2, 2, 8, 128>}]} {
    %c0 = arith.constant 0 : index
    %c0_0 = arith.constant 0 : index
    %c0_1 = arith.constant 0 : index
    %c0_2 = arith.constant 0 : index
    %0 = vector.load %arg1[%c0, %c0_0, %c0_1, %c0_2] : memref<2x2x8x128xf32, #tpu.memory_space<vmem>>, vector<2x1x8x128xf32>
    %1 = vector.shape_cast %0 : vector<2x1x8x128xf32> to vector<2x8x128xf32>
    %c0_3 = arith.constant 0 : index
    %c1 = arith.constant 1 : index
    %c0_4 = arith.constant 0 : index
    %c0_5 = arith.constant 0 : index
    %2 = vector.load %arg1[%c0_3, %c1, %c0_4, %c0_5] : memref<2x2x8x128xf32, #tpu.memory_space<vmem>>, vector<2x1x8x128xf32>
    %3 = vector.shape_cast %2 : vector<2x1x8x128xf32> to vector<2x8x128xf32>
    %c0_6 = arith.constant 0 : index
    %c0_7 = arith.constant 0 : index
    %4 = memref.load %arg2[%c0_6, %c0_7] : memref<4x2xf32, #tpu.memory_space<smem>>
    %5 = vector.broadcast %4 : f32 to vector<2x8x128xf32>
    %6 = arith.mulf %5, %1 : vector<2x8x128xf32>
    %c0_8 = arith.constant 0 : index
    %c1_9 = arith.constant 1 : index
    %7 = memref.load %arg2[%c0_8, %c1_9] : memref<4x2xf32, #tpu.memory_space<smem>>
    %8 = vector.broadcast %7 : f32 to vector<2x8x128xf32>
    %9 = arith.mulf %8, %3 : vector<2x8x128xf32>
    %10 = arith.addf %6, %9 : vector<2x8x128xf32>
    %c0_10 = arith.constant 0 : index
    %11 = memref.load %arg3[%c0_10] : memref<4xf32, #tpu.memory_space<smem>>
    %12 = vector.broadcast %11 : f32 to vector<2x8x128xf32>
    %13 = arith.addf %10, %12 : vector<2x8x128xf32>
    %cst = arith.constant 0.000000e+00 : f32
    %14 = vector.broadcast %cst : f32 to vector<2x8x128xf32>
    %15 = arith.maximumf %13, %14 : vector<2x8x128xf32>
    %c0_11 = arith.constant 0 : index
    %c0_12 = arith.constant 0 : index
    %16 = memref.load %arg4[%c0_11, %c0_12] : memref<2x4xf32, #tpu.memory_space<smem>>
    %17 = vector.broadcast %16 : f32 to vector<2x8x128xf32>
    %18 = arith.mulf %15, %17 : vector<2x8x128xf32>
    %c0_13 = arith.constant 0 : index
    %19 = memref.load %arg5[%c0_13] : memref<2xf32, #tpu.memory_space<smem>>
    %20 = vector.broadcast %19 : f32 to vector<2x8x128xf32>
    %21 = arith.addf %18, %20 : vector<2x8x128xf32>
    %c1_14 = arith.constant 1 : index
    %c0_15 = arith.constant 0 : index
    %22 = memref.load %arg4[%c1_14, %c0_15] : memref<2x4xf32, #tpu.memory_space<smem>>
    %23 = vector.broadcast %22 : f32 to vector<2x8x128xf32>
    %24 = arith.mulf %15, %23 : vector<2x8x128xf32>
    %c1_16 = arith.constant 1 : index
    %25 = memref.load %arg5[%c1_16] : memref<2xf32, #tpu.memory_space<smem>>
    %26 = vector.broadcast %25 : f32 to vector<2x8x128xf32>
    %27 = arith.addf %24, %26 : vector<2x8x128xf32>
    %c1_17 = arith.constant 1 : index
    %c0_18 = arith.constant 0 : index
    %28 = memref.load %arg2[%c1_17, %c0_18] : memref<4x2xf32, #tpu.memory_space<smem>>
    %29 = vector.broadcast %28 : f32 to vector<2x8x128xf32>
    %30 = arith.mulf %29, %1 : vector<2x8x128xf32>
    %c1_19 = arith.constant 1 : index
    %c1_20 = arith.constant 1 : index
    %31 = memref.load %arg2[%c1_19, %c1_20] : memref<4x2xf32, #tpu.memory_space<smem>>
    %32 = vector.broadcast %31 : f32 to vector<2x8x128xf32>
    %33 = arith.mulf %32, %3 : vector<2x8x128xf32>
    %34 = arith.addf %30, %33 : vector<2x8x128xf32>
    %c1_21 = arith.constant 1 : index
    %35 = memref.load %arg3[%c1_21] : memref<4xf32, #tpu.memory_space<smem>>
    %36 = vector.broadcast %35 : f32 to vector<2x8x128xf32>
    %37 = arith.addf %34, %36 : vector<2x8x128xf32>
    %cst_22 = arith.constant 0.000000e+00 : f32
    %38 = vector.broadcast %cst_22 : f32 to vector<2x8x128xf32>
    %39 = arith.maximumf %37, %38 : vector<2x8x128xf32>
    %c0_23 = arith.constant 0 : index
    %c1_24 = arith.constant 1 : index
    %40 = memref.load %arg4[%c0_23, %c1_24] : memref<2x4xf32, #tpu.memory_space<smem>>
    %41 = vector.broadcast %40 : f32 to vector<2x8x128xf32>
    %42 = arith.mulf %39, %41 : vector<2x8x128xf32>
    %43 = arith.addf %21, %42 : vector<2x8x128xf32>
    %c1_25 = arith.constant 1 : index
    %c1_26 = arith.constant 1 : index
    %44 = memref.load %arg4[%c1_25, %c1_26] : memref<2x4xf32, #tpu.memory_space<smem>>
    %45 = vector.broadcast %44 : f32 to vector<2x8x128xf32>
    %46 = arith.mulf %39, %45 : vector<2x8x128xf32>
    %47 = arith.addf %27, %46 : vector<2x8x128xf32>
    %c2 = arith.constant 2 : index
    %c0_27 = arith.constant 0 : index
    %48 = memref.load %arg2[%c2, %c0_27] : memref<4x2xf32, #tpu.memory_space<smem>>
    %49 = vector.broadcast %48 : f32 to vector<2x8x128xf32>
    %50 = arith.mulf %49, %1 : vector<2x8x128xf32>
    %c2_28 = arith.constant 2 : index
    %c1_29 = arith.constant 1 : index
    %51 = memref.load %arg2[%c2_28, %c1_29] : memref<4x2xf32, #tpu.memory_space<smem>>
    %52 = vector.broadcast %51 : f32 to vector<2x8x128xf32>
    %53 = arith.mulf %52, %3 : vector<2x8x128xf32>
    %54 = arith.addf %50, %53 : vector<2x8x128xf32>
    %c2_30 = arith.constant 2 : index
    %55 = memref.load %arg3[%c2_30] : memref<4xf32, #tpu.memory_space<smem>>
    %56 = vector.broadcast %55 : f32 to vector<2x8x128xf32>
    %57 = arith.addf %54, %56 : vector<2x8x128xf32>
    %cst_31 = arith.constant 0.000000e+00 : f32
    %58 = vector.broadcast %cst_31 : f32 to vector<2x8x128xf32>
    %59 = arith.maximumf %57, %58 : vector<2x8x128xf32>
    %c0_32 = arith.constant 0 : index
    %c2_33 = arith.constant 2 : index
    %60 = memref.load %arg4[%c0_32, %c2_33] : memref<2x4xf32, #tpu.memory_space<smem>>
    %61 = vector.broadcast %60 : f32 to vector<2x8x128xf32>
    %62 = arith.mulf %59, %61 : vector<2x8x128xf32>
    %63 = arith.addf %43, %62 : vector<2x8x128xf32>
    %c1_34 = arith.constant 1 : index
    %c2_35 = arith.constant 2 : index
    %64 = memref.load %arg4[%c1_34, %c2_35] : memref<2x4xf32, #tpu.memory_space<smem>>
    %65 = vector.broadcast %64 : f32 to vector<2x8x128xf32>
    %66 = arith.mulf %59, %65 : vector<2x8x128xf32>
    %67 = arith.addf %47, %66 : vector<2x8x128xf32>
    %c3 = arith.constant 3 : index
    %c0_36 = arith.constant 0 : index
    %68 = memref.load %arg2[%c3, %c0_36] : memref<4x2xf32, #tpu.memory_space<smem>>
    %69 = vector.broadcast %68 : f32 to vector<2x8x128xf32>
    %70 = arith.mulf %69, %1 : vector<2x8x128xf32>
    %c3_37 = arith.constant 3 : index
    %c1_38 = arith.constant 1 : index
    %71 = memref.load %arg2[%c3_37, %c1_38] : memref<4x2xf32, #tpu.memory_space<smem>>
    %72 = vector.broadcast %71 : f32 to vector<2x8x128xf32>
    %73 = arith.mulf %72, %3 : vector<2x8x128xf32>
    %74 = arith.addf %70, %73 : vector<2x8x128xf32>
    %c3_39 = arith.constant 3 : index
    %75 = memref.load %arg3[%c3_39] : memref<4xf32, #tpu.memory_space<smem>>
    %76 = vector.broadcast %75 : f32 to vector<2x8x128xf32>
    %77 = arith.addf %74, %76 : vector<2x8x128xf32>
    %cst_40 = arith.constant 0.000000e+00 : f32
    %78 = vector.broadcast %cst_40 : f32 to vector<2x8x128xf32>
    %79 = arith.maximumf %77, %78 : vector<2x8x128xf32>
    %c0_41 = arith.constant 0 : index
    %c3_42 = arith.constant 3 : index
    %80 = memref.load %arg4[%c0_41, %c3_42] : memref<2x4xf32, #tpu.memory_space<smem>>
    %81 = vector.broadcast %80 : f32 to vector<2x8x128xf32>
    %82 = arith.mulf %79, %81 : vector<2x8x128xf32>
    %83 = arith.addf %63, %82 : vector<2x8x128xf32>
    %c1_43 = arith.constant 1 : index
    %c3_44 = arith.constant 3 : index
    %84 = memref.load %arg4[%c1_43, %c3_44] : memref<2x4xf32, #tpu.memory_space<smem>>
    %85 = vector.broadcast %84 : f32 to vector<2x8x128xf32>
    %86 = arith.mulf %79, %85 : vector<2x8x128xf32>
    %87 = arith.addf %67, %86 : vector<2x8x128xf32>
    %c0_45 = arith.constant 0 : index
    %c0_46 = arith.constant 0 : index
    %c0_47 = arith.constant 0 : index
    %c0_48 = arith.constant 0 : index
    %88 = vector.load %arg6[%c0_45, %c0_46, %c0_47, %c0_48] : memref<2x2x8x128xf32, #tpu.memory_space<vmem>>, vector<2x1x8x128xf32>
    %89 = vector.shape_cast %88 : vector<2x1x8x128xf32> to vector<2x8x128xf32>
    %90 = vector.shape_cast %83 : vector<2x8x128xf32> to vector<2x1x8x128xf32>
    tpu.vector_store %arg6[%c0_45, %c0_46, %c0_47, %c0_48], %90 {strides = array<i32>} : memref<2x2x8x128xf32, #tpu.memory_space<vmem>>, vector<2x1x8x128xf32>,
    %c0_49 = arith.constant 0 : index
    %c1_50 = arith.constant 1 : index
    %c0_51 = arith.constant 0 : index
    %c0_52 = arith.constant 0 : index
    %91 = vector.load %arg6[%c0_49, %c1_50, %c0_51, %c0_52] : memref<2x2x8x128xf32, #tpu.memory_space<vmem>>, vector<2x1x8x128xf32>
    %92 = vector.shape_cast %91 : vector<2x1x8x128xf32> to vector<2x8x128xf32>
    %93 = vector.shape_cast %87 : vector<2x8x128xf32> to vector<2x1x8x128xf32>
    tpu.vector_store %arg6[%c0_49, %c1_50, %c0_51, %c0_52], %93 {strides = array<i32>} : memref<2x2x8x128xf32, #tpu.memory_space<vmem>>, vector<2x1x8x128xf32>,
    return
  }
  func.func @transform_0(%arg0: i32) -> (i32, i32, i32, i32) {
    %c0_i32 = arith.constant 0 : i32
    %c0_i32_0 = arith.constant 0 : i32
    %c0_i32_1 = arith.constant 0 : i32
    %c0_i32_2 = arith.constant 0 : i32
    %c0_i32_3 = arith.constant 0 : i32
    return %c0_i32, %c0_i32_0, %c0_i32_1, %c0_i32_2 : i32, i32, i32, i32
  }
  func.func @transform_1(%arg0: i32) -> (i32, i32) {
    %c0_i32 = arith.constant 0 : i32
    %c0_i32_0 = arith.constant 0 : i32
    %c0_i32_1 = arith.constant 0 : i32
    return %c0_i32, %c0_i32_0 : i32, i32
  }
  func.func @transform_2(%arg0: i32) -> i32 {
    %c0_i32 = arith.constant 0 : i32
    %c0_i32_0 = arith.constant 0 : i32
    return %c0_i32 : i32
  }
  func.func @transform_3(%arg0: i32) -> (i32, i32) {
    %c0_i32 = arith.constant 0 : i32
    %c0_i32_0 = arith.constant 0 : i32
    %c0_i32_1 = arith.constant 0 : i32
    return %c0_i32, %c0_i32_0 : i32, i32
  }
  func.func @transform_4(%arg0: i32) -> i32 {
    %c0_i32 = arith.constant 0 : i32
    %c0_i32_0 = arith.constant 0 : i32
    return %c0_i32 : i32
  }
  func.func @transform_5(%arg0: i32) -> (i32, i32, i32, i32) {
    %c0_i32 = arith.constant 0 : i32
    %c0_i32_0 = arith.constant 0 : i32
    %c0_i32_1 = arith.constant 0 : i32
    %c0_i32_2 = arith.constant 0 : i32
    %c0_i32_3 = arith.constant 0 : i32
    return %c0_i32, %c0_i32_0, %c0_i32_1, %c0_i32_2 : i32, i32, i32, i32
  }
}

</mosaic_0001>

<llo_original>
// kernel: tpu_custom_call.1
$region0: #{tpu_custom_call.1}
  #allocation0 [shape = 'u32[]', space=smem, size = 0x4, offset = 0x4, fixed_abs, tag = 'smem constant byte address 0x4 - core index']
  #allocation1 [shape = 'u32[144,128]{1,0:T(1,128)}', space=vmem, size = 0x12000, scoped, tag = 'internal scratch']
  #allocation13 [shape = 's32[]', space=sflag, size = 0x4, offset = 0, fixed_abs, tag = 'sflag constant byte address 0x0 - dummy sync flag']
  #allocation15 [shape = 's32[]', space=sflag, size = 0x4, offset = 0, fixed_abs, tag = 'sflag constant byte address 0x0 - dummy sync flag']
  %s0 = inlined_call_operand.hbm [shape: f32[2,2,2,128], index: 0, kind: input, shape index: {}]
  %s1 = inlined_call_operand.vmem [shape: f32[4,2], index: 1, kind: input, shape index: {}]
  %s2 = inlined_call_operand.vmem [shape: f32[4], index: 2, kind: input, shape index: {}]
  %s3 = inlined_call_operand.vmem [shape: f32[2,4], index: 3, kind: input, shape index: {}]
  %s4 = inlined_call_operand.vmem [shape: f32[2], index: 4, kind: input, shape index: {}]
  %s5 = inlined_call_operand.hbm [shape: f32[2,2,2,128], index: 5, kind: output, shape index: {}]
  %s6 = sld [smem:[#allocation0]]
  $region50: #{tpu_custom_call.1} parent=0
    _
  %s8 = ssub.s32 1, %s6
  %s9 = scalar_select 0, %s8, %s6
  $region1: #{tpu_custom_call.1} parent=0
    #allocation2 [shape = 'u8[16384]{0}', space=vmem, size = 0x4000, scoped, tag = 'input window, operand 0, single buffered']
    #allocation3 [shape = 's32[1]{0}', space=sflag, size = 0x4, scoped, tag = 'scoped memory for tpu_custom_call.1']
    #allocation4 [shape = 's32[1]{0}', space=sflag, size = 0x4, scoped, tag = 'scoped memory for tpu_custom_call.1']
    #allocation5 [shape = 's32[1]{0}', space=sflag, size = 0x4, scoped, tag = 'scoped memory for tpu_custom_call.1']
    #allocation6 [shape = 'u8[2048]{0}', space=smem, size = 0x800, scoped, tag = 'input window, operand 1, single buffered']
    #allocation7 [shape = 'u8[512]{0}', space=smem, size = 0x200, scoped, tag = 'input window, operand 2, single buffered']
    #allocation8 [shape = 's32[1]{0}', space=sflag, size = 0x4, scoped, tag = 'scoped memory for tpu_custom_call.1']
    #allocation9 [shape = 'u8[1024]{0}', space=smem, size = 0x400, scoped, tag = 'input window, operand 3, single buffered']
    #allocation10 [shape = 'u8[512]{0}', space=smem, size = 0x200, scoped, tag = 'input window, operand 4, single buffered']
    #allocation11 [shape = 's32[1]{0}', space=sflag, size = 0x4, scoped, tag = 'scoped memory for tpu_custom_call.1']
    #allocation12 [shape = 'u8[16384]{0}', space=vmem, size = 0x4000, scoped, tag = 'output window, operand 0, single buffered']
    %10 = vsyncpa [#allocation3], 0
    %11 = vsyncpa [#allocation5], 0
    %12 = vsyncpa [#allocation8], 0
    %13 = vsyncpa [#allocation11], 0
    %14 = vsyncpa [#allocation4], 0
    // Predicated region
    $region2: #{tpu_custom_call.1} parent=1 // pred_check
      _
    $region3: #{tpu_custom_call.1} parent=1 // pred_check_branch
      %16 = sbr.rel (0) target = $region5
    $region4: #{tpu_custom_call.1} parent=1 // pred_region
      #allocation14 [shape = 'u32[6]{0}', space=smem, size = 0x18, scoped, tag = 'DMA stride descriptor']
      %s18 = ssub.s32 512, 128
      %19 = vsyncadd [#allocation3], %s18
      %s21 = sshll.u32 1, 14
      %s22 = sxor.u32 4294967295, %s21
      %s24 = sld [smem:[#allocation0]]
      %s25 = sadd.s32 2, %s24
      %s27 = sshll.u32 7, 26
      %s28 = sxor.u32 4294967295, %s27
      %s29 = sand.u32 0, %s28
      %s30 = sshll.u32 %s25, 26
      %s31 = sor.u32 %s29, %s30
      %s32 = sshll.u32 [#allocation2], 4
      %s33 = int_to_ptr.vmem [resolvable:$true] %s32
      %39 = sst [smem:[#allocation14]] 32
      %s40 = scalar_lea.smem [#allocation14], 1
      %41 = sst [smem:[%s40]] 128
      %s42 = scalar_lea.smem [#allocation14], 2
      %43 = sst [smem:[%s42]] 1
      %s44 = scalar_lea.smem [#allocation14], 3
      %45 = sst [smem:[%s44]] 32
      %s46 = scalar_lea.smem [#allocation14], 4
      %47 = sst [smem:[%s46]] 32
      %s48 = scalar_lea.smem [#allocation14], 5
      %49 = sst [smem:[%s48]] 2
      %51 = dma.general %s0, 128, %s33, [#allocation3], [#allocation13], [#allocation14], %s31, 0
    $region5: #{tpu_custom_call.1} parent=1 // pred_fallthru
      _
    // Predicated region
    $region6: #{tpu_custom_call.1} parent=1 // pred_check
      _
    $region7: #{tpu_custom_call.1} parent=1 // pred_check_branch
      %53 = sbr.rel (0) target = $region9
    $region8: #{tpu_custom_call.1} parent=1 // pred_region
      %s55 = ssub.s32 64, 64
      %56 = vsyncadd [#allocation5], %s55
      %s58 = sshll.u32 %s1, 4
      %s59 = int_to_ptr.vmem [resolvable:$true] %s58
      %61 = dma.vmem_to_smem %s59, 64, [#allocation6], [#allocation5]
    $region9: #{tpu_custom_call.1} parent=1 // pred_fallthru
      _
    // Predicated region
    $region10: #{tpu_custom_call.1} parent=1 // pred_check
      _
    $region11: #{tpu_custom_call.1} parent=1 // pred_check_branch
      %63 = sbr.rel (0) target = $region13
    $region12: #{tpu_custom_call.1} parent=1 // pred_region
      %s65 = ssub.s32 16, 16
      %66 = vsyncadd [#allocation8], %s65
      %s68 = sshll.u32 %s2, 4
      %s69 = int_to_ptr.vmem [resolvable:$true] %s68
      %71 = dma.vmem_to_smem %s69, 16, [#allocation7], [#allocation8]
    $region13: #{tpu_custom_call.1} parent=1 // pred_fallthru
      _
    // Predicated region
    $region14: #{tpu_custom_call.1} parent=1 // pred_check
      _
    $region15: #{tpu_custom_call.1} parent=1 // pred_check_branch
      %73 = sbr.rel (0) target = $region17
    $region16: #{tpu_custom_call.1} parent=1 // pred_region
      %s75 = ssub.s32 32, 32
      %76 = vsyncadd [#allocation8], %s75
      %s78 = sshll.u32 %s3, 4
      %s79 = int_to_ptr.vmem [resolvable:$true] %s78
      %81 = dma.vmem_to_smem %s79, 32, [#allocation9], [#allocation8]
    $region17: #{tpu_custom_call.1} parent=1 // pred_fallthru
      _
    // Predicated region
    $region18: #{tpu_custom_call.1} parent=1 // pred_check
      _
    $region19: #{tpu_custom_call.1} parent=1 // pred_check_branch
      %83 = sbr.rel (0) target = $region21
    $region20: #{tpu_custom_call.1} parent=1 // pred_region
      %s85 = ssub.s32 16, 16
      %86 = vsyncadd [#allocation11], %s85
      %s88 = sshll.u32 %s4, 4
      %s89 = int_to_ptr.vmem [resolvable:$true] %s88
      %91 = dma.vmem_to_smem %s89, 16, [#allocation10], [#allocation11]
    $region21: #{tpu_custom_call.1} parent=1 // pred_fallthru
      _
    // Predicated region
    $region22: #{tpu_custom_call.1} parent=1 // pred_check
      _
    $region23: #{tpu_custom_call.1} parent=1 // pred_check_branch
      %93 = sbr.rel (0) target = $region25
    $region24: #{tpu_custom_call.1} parent=1 // pred_region
      %94 = dma.done [#allocation3], 512
    $region25: #{tpu_custom_call.1} parent=1 // pred_fallthru
      _
    // Predicated region
    $region26: #{tpu_custom_call.1} parent=1 // pred_check
      _
    $region27: #{tpu_custom_call.1} parent=1 // pred_check_branch
      %96 = sbr.rel (0) target = $region29
    $region28: #{tpu_custom_call.1} parent=1 // pred_region
      %97 = dma.done [#allocation5], 64
    $region29: #{tpu_custom_call.1} parent=1 // pred_fallthru
      _
    // Predicated region
    $region30: #{tpu_custom_call.1} parent=1 // pred_check
      _
    $region31: #{tpu_custom_call.1} parent=1 // pred_check_branch
      %99 = sbr.rel (0) target = $region33
    $region32: #{tpu_custom_call.1} parent=1 // pred_region
      %100 = dma.done [#allocation8], 16
    $region33: #{tpu_custom_call.1} parent=1 // pred_fallthru
      _
    // Predicated region
    $region34: #{tpu_custom_call.1} parent=1 // pred_check
      _
    $region35: #{tpu_custom_call.1} parent=1 // pred_check_branch
      %102 = sbr.rel (0) target = $region37
    $region36: #{tpu_custom_call.1} parent=1 // pred_region
      %103 = dma.done [#allocation8], 32
    $region37: #{tpu_custom_call.1} parent=1 // pred_fallthru
      _
    // Predicated region
    $region38: #{tpu_custom_call.1} parent=1 // pred_check
      _
    $region39: #{tpu_custom_call.1} parent=1 // pred_check_branch
      %105 = sbr.rel (0) target = $region41
    $region40: #{tpu_custom_call.1} parent=1 // pred_region
      %106 = dma.done [#allocation11], 16
    $region41: #{tpu_custom_call.1} parent=1 // pred_fallthru
      _
    %107 = sfence
    %v108 = vld [vmem:[#allocation2] sm:$0xff]
    %v109 = vld [vmem:[#allocation2 + $0x10] sm:$0xff]
    %s110 = scalar_lea.vmem [#allocation2], 8
    %v111 = vld [vmem:[%s110] sm:$0xff]
    %v112 = vld [vmem:[%s110 + $0x10] sm:$0xff]
    %s113 = sld [smem:[#allocation6]]
    %v114 = vstv %s113
    %v115 = vmul.f32 %v114, %v108
    %v116 = vmul.f32 %v114, %v109
    %s117 = sld [smem:[#allocation6 + $0x1]]
    %v118 = vstv %s117
    %v119 = vmul.f32 %v118, %v111
    %v120 = vmul.f32 %v118, %v112
    %v121 = vadd.f32 %v115, %v119
    %v122 = vadd.f32 %v116, %v120
    %s123 = sld [smem:[#allocation7]]
    %v124 = vstv %s123
    %v125 = vadd.f32 %v121, %v124
    %v126 = vadd.f32 %v122, %v124
    %v127 = vmax.f32 %v125, 0.0
    %v128 = vmax.f32 %v126, 0.0
    %s129 = sld [smem:[#allocation9]]
    %v130 = vstv %s129
    %v131 = vmul.f32 %v127, %v130
    %v132 = vmul.f32 %v128, %v130
    %s133 = sld [smem:[#allocation10]]
    %v134 = vstv %s133
    %v135 = vadd.f32 %v131, %v134
    %v136 = vadd.f32 %v132, %v134
    %s137 = sld [smem:[#allocation9 + $0x80]]
    %v138 = vstv %s137
    %v139 = vmul.f32 %v127, %v138
    %v140 = vmul.f32 %v128, %v138
    %s141 = sld [smem:[#allocation10 + $0x1]]
    %v142 = vstv %s141
    %v143 = vadd.f32 %v139, %v142
    %v144 = vadd.f32 %v140, %v142
    %s145 = sld [smem:[#allocation6 + $0x80]]
    %v146 = vstv %s145
    %v147 = vmul.f32 %v146, %v108
    %v148 = vmul.f32 %v146, %v109
    %s149 = sld [smem:[#allocation6 + $0x81]]
    %v150 = vstv %s149
    %v151 = vmul.f32 %v150, %v111
    %v152 = vmul.f32 %v150, %v112
    %v153 = vadd.f32 %v147, %v151
    %v154 = vadd.f32 %v148, %v152
    %s155 = sld [smem:[#allocation7 + $0x1]]
    %v156 = vstv %s155
    %v157 = vadd.f32 %v153, %v156
    %v158 = vadd.f32 %v154, %v156
    %v159 = vmax.f32 %v157, 0.0
    %v160 = vmax.f32 %v158, 0.0
    %s161 = sld [smem:[#allocation9 + $0x1]]
    %v162 = vstv %s161
    %v163 = vmul.f32 %v159, %v162
    %v164 = vmul.f32 %v160, %v162
    %v165 = vadd.f32 %v135, %v163
    %v166 = vadd.f32 %v136, %v164
    %s167 = sld [smem:[#allocation9 + $0x81]]
    %v168 = vstv %s167
    %v169 = vmul.f32 %v159, %v168
    %v170 = vmul.f32 %v160, %v168
    %v171 = vadd.f32 %v143, %v169
    %v172 = vadd.f32 %v144, %v170
    %s173 = sld [smem:[#allocation6 + $0x100]]
    %v174 = vstv %s173
    %v175 = vmul.f32 %v174, %v108
    %v176 = vmul.f32 %v174, %v109
    %s177 = sld [smem:[#allocation6 + $0x101]]
    %v178 = vstv %s177
    %v179 = vmul.f32 %v178, %v111
    %v180 = vmul.f32 %v178, %v112
    %v181 = vadd.f32 %v175, %v179
    %v182 = vadd.f32 %v176, %v180
    %s183 = sld [smem:[#allocation7 + $0x2]]
    %v184 = vstv %s183
    %v185 = vadd.f32 %v181, %v184
    %v186 = vadd.f32 %v182, %v184
    %v187 = vmax.f32 %v185, 0.0
    %v188 = vmax.f32 %v186, 0.0
    %s189 = sld [smem:[#allocation9 + $0x2]]
    %v190 = vstv %s189
    %v191 = vmul.f32 %v187, %v190
    %v192 = vmul.f32 %v188, %v190
    %v193 = vadd.f32 %v165, %v191
    %v194 = vadd.f32 %v166, %v192
    %s195 = sld [smem:[#allocation9 + $0x82]]
    %v196 = vstv %s195
    %v197 = vmul.f32 %v187, %v196
    %v198 = vmul.f32 %v188, %v196
    %v199 = vadd.f32 %v171, %v197
    %v200 = vadd.f32 %v172, %v198
    %s201 = sld [smem:[#allocation6 + $0x180]]
    %v202 = vstv %s201
    %v203 = vmul.f32 %v202, %v108
    %v204 = vmul.f32 %v202, %v109
    %s205 = sld [smem:[#allocation6 + $0x181]]
    %v206 = vstv %s205
    %v207 = vmul.f32 %v206, %v111
    %v208 = vmul.f32 %v206, %v112
    %v209 = vadd.f32 %v203, %v207
    %v210 = vadd.f32 %v204, %v208
    %s211 = sld [smem:[#allocation7 + $0x3]]
    %v212 = vstv %s211
    %v213 = vadd.f32 %v209, %v212
    %v214 = vadd.f32 %v210, %v212
    %v215 = vmax.f32 %v213, 0.0
    %v216 = vmax.f32 %v214, 0.0
    %s217 = sld [smem:[#allocation9 + $0x3]]
    %v218 = vstv %s217
    %v219 = vmul.f32 %v215, %v218
    %v220 = vmul.f32 %v216, %v218
    %v221 = vadd.f32 %v193, %v219
    %v222 = vadd.f32 %v194, %v220
    %s223 = sld [smem:[#allocation9 + $0x83]]
    %v224 = vstv %s223
    %v225 = vmul.f32 %v215, %v224
    %v226 = vmul.f32 %v216, %v224
    %v227 = vadd.f32 %v199, %v225
    %v228 = vadd.f32 %v200, %v226
    %229 = vst [vmem:[#allocation12] sm:$0xff] %v221
    %230 = vst [vmem:[#allocation12 + $0x10] sm:$0xff] %v222
    %s231 = scalar_lea.vmem [#allocation12], 8
    %232 = vst [vmem:[%s231] sm:$0xff] %v227
    %233 = vst [vmem:[%s231 + $0x10] sm:$0xff] %v228
    // Predicated region
    $region42: #{tpu_custom_call.1} parent=1 // pred_check
      _
    $region43: #{tpu_custom_call.1} parent=1 // pred_check_branch
      %235 = sbr.rel (0) target = $region45
    $region44: #{tpu_custom_call.1} parent=1 // pred_region
      #allocation16 [shape = 'u32[6]{0}', space=smem, size = 0x18, scoped, tag = 'DMA stride descriptor']
      %s237 = ssub.s32 512, 128
      %238 = vsyncadd [#allocation4], %s237
      %s240 = sshll.u32 1, 14
      %s241 = sxor.u32 4294967295, %s240
      %s244 = sshll.u32 7, 18
      %s245 = sxor.u32 4294967295, %s244
      %s246 = sand.u32 0, %s245
      %s248 = sor.u32 %s246, 0
      %s250 = sshll.u32 3, 24
      %s251 = sxor.u32 4294967295, %s250
      %s252 = sand.u32 %s248, %s251
      %s254 = sor.u32 %s252, 0
      %s255 = sshll.u32 [#allocation12], 4
      %s256 = int_to_ptr.vmem [resolvable:$true] %s255
      %262 = sst [smem:[#allocation16]] 128
      %s263 = scalar_lea.smem [#allocation16], 1
      %264 = sst [smem:[%s263]] 32
      %s265 = scalar_lea.smem [#allocation16], 2
      %266 = sst [smem:[%s265]] 1
      %s267 = scalar_lea.smem [#allocation16], 3
      %268 = sst [smem:[%s267]] 32
      %s269 = scalar_lea.smem [#allocation16], 4
      %270 = sst [smem:[%s269]] 32
      %s271 = scalar_lea.smem [#allocation16], 5
      %272 = sst [smem:[%s271]] 2
      %274 = dma.general %s256, 128, %s5, [#allocation4], [#allocation15], [#allocation16], %s254, 0
    $region45: #{tpu_custom_call.1} parent=1 // pred_fallthru
      _
    // Predicated region
    $region46: #{tpu_custom_call.1} parent=1 // pred_check
      _
    $region47: #{tpu_custom_call.1} parent=1 // pred_check_branch
      %276 = sbr.rel (0) target = $region49
    $region48: #{tpu_custom_call.1} parent=1 // pred_region
      %277 = dma.done [#allocation4], 512
    $region49: #{tpu_custom_call.1} parent=1 // pred_fallthru
      _
    %278 = vsyncpa [#allocation3], 1
    %279 = vsyncpa [#allocation4], 1
    %280 = vsyncpa [#allocation5], 1
    %281 = vsyncpa [#allocation8], 1
    %282 = vsyncpa [#allocation11], 1

</llo_original>
